<compile_context>
chip_gen: v7x
topology: tpu7x:2x2x1
jax: 0.10.0
libtpu: 0.0.40
codegen_flags: <defaults>
</compile_context>

<pallas_src>
import numpy as np
import jax
import jax.numpy as jnp
from jax.experimental import pallas as pl
from jax.experimental.pallas import tpu as pltpu


def _make_kernel(T, C, S):
    """Kernel body for one grid step = S recurrence chunks of T steps each."""

    def kernel(carry0_ref, wflat_ref, q_ref, o_ref, carry_ref):
        # Initialize the persistent carry scratch on the first grid step only.
        @pl.when(pl.program_id(0) == 0)
        def _():
            carry_ref[...] = carry0_ref[...]

        # Loop-invariant loads, hoisted out of the serial loop.
        wflat = wflat_ref[...]                 # (C, T*C) = [W0^1 | W0^2 | ... | W0^T]
        wlast = wflat[:, (T - 1) * C:]         # (C, C)   = W0^T

        def chunk_step(s, carry):
            q_s = q_ref[s]                     # (B, T*C) lane-dense load
            # Off-chain: one wide dot yields all T outputs of this chunk.
            out = jnp.dot(carry, wflat, preferred_element_type=jnp.float32) + q_s
            o_ref[s] = out.astype(o_ref.dtype)     # lane-dense slab store
            # On-chain: a single small dot advances the carry by T steps.
            # (For very long sequences where compounded bf16-pass rounding of
            #  the carry matters, add precision=jax.lax.Precision.HIGHEST
            #  here only -- the wide dot / pre-pass can stay at default.)
            return (jnp.dot(carry, wlast, preferred_element_type=jnp.float32)
                    + q_s[:, (T - 1) * C:])

        carry_ref[...] = jax.lax.fori_loop(0, S, chunk_step, carry_ref[...],
                                           unroll=True)

    return kernel


def strided_conv_forward(x_bcl, weight, n_dil, *, chunk_steps=None,
                         chunks_per_block=2):
    """Pallas equivalent of StridedConv.forward.

    x_bcl:  (B, C_in, L) float32  (PyTorch NCL layout)
    weight: (C_out, C_in, K) float32
    """
    B, C_in, L = x_bcl.shape
    C_out, C_in_w, K = weight.shape
    assert C_in_w == C_in
    # The in-place write x[..., i+1] = a[..., i] only type-checks in PyTorch
    # when n_out_chan == n_in_chan; the recurrence relies on the same.
    assert C_out == C_in
    C = C_in
    filter_size = (K - 1) * n_dil + 1
    n_steps = L - filter_size
    assert n_steps > 0

    # T steps fold into one MXU dot; T*C ~= 128 keeps per-chunk loads/stores
    # lane-dense.  S chunks per grid step controls the pipelined VMEM block
    # size (halve on v7x's 64 MiB VMEM, grow on v5e/v6e's 128 MiB).
    T = chunk_steps if chunk_steps is not None else max(1, 128 // C)
    n_chunks = -(-n_steps // T)
    S = min(chunks_per_block, n_chunks)
    n_blocks = -(-n_chunks // S)
    n_chunks_pad = n_blocks * S
    n_steps_pad = n_chunks_pad * T

    x_f32 = x_bcl.astype(jnp.float32)
    w = weight.astype(jnp.float32)

    # ---- Parallel pre-pass (taps k >= 1 never see recurrence output). ------
    # All K-1 taps fused into ONE contraction over (tap, channel), emitted
    # straight from the NCL input (no full-array transpose).
    if K > 1:
        x_taps = jnp.stack(
            [jax.lax.slice_in_dim(x_f32, k * n_dil, k * n_dil + n_steps, axis=2)
             for k in range(1, K)], axis=0)                    # (K-1, B, C, n_steps)
        pre = jnp.einsum('kbcl,ock->lbo', x_taps, w[:, :, 1:],
                         preferred_element_type=jnp.float32)   # (n_steps, B, C)
    else:
        pre = jnp.zeros((n_steps, B, C), jnp.float32)
    pre = jnp.pad(pre, ((0, n_steps_pad - n_steps), (0, 0), (0, 0)))

    # ---- Powers of W0 (HIGHEST precision: they multiply the carry). --------
    W0 = w[:, :, 0].T                                          # (C_in, C_out), row-vector form
    eye = jnp.eye(C, dtype=jnp.float32)

    def _pow(P, _):
        Pn = jnp.dot(P, W0, precision=jax.lax.Precision.HIGHEST)
        return Pn, Pn

    _, p1T = jax.lax.scan(_pow, eye, None, length=T)           # (T, C, C): W0^1..W0^T
    powers = jnp.concatenate([eye[None], p1T], axis=0)         # (T+1, C, C): W0^0..W0^T

    # wflat[:, t*C:(t+1)*C] = W0^(t+1)
    wflat = jnp.transpose(p1T, (1, 0, 2)).reshape(C, T * C)

    # Block-Toeplitz within-chunk operator: M[j*C+i, t*C+o] = (W0^(t-j))[i,o] for t>=j.
    jj, tt = jnp.meshgrid(jnp.arange(T), jnp.arange(T), indexing='ij')
    d = tt - jj
    M = powers[jnp.clip(d, 0, T)] * (d >= 0)[:, :, None, None].astype(jnp.float32)
    M_flat = jnp.transpose(M, (0, 2, 1, 3)).reshape(T * C, T * C)

    # q[c, b, t*C+o] = sum_{j<=t} pre[c*T+j, b, :] @ W0^(t-j)  (one parallel matmul)
    pre_flat = (pre.reshape(n_chunks_pad, T, B, C)
                   .transpose(0, 2, 1, 3)
                   .reshape(n_chunks_pad, B, T * C))
    q = jnp.einsum('nbj,jk->nbk', pre_flat, M_flat,
                   preferred_element_type=jnp.float32)          # (n_chunks_pad, B, T*C)

    carry0 = x_f32[:, :, 0]                                     # (B, C) = y[0]

    kernel = _make_kernel(T, C, S)
    y_flat = pl.pallas_call(
        kernel,
        out_shape=jax.ShapeDtypeStruct((n_chunks_pad, B, T * C), jnp.float32),
        grid=(n_blocks,),
        in_specs=[
            pl.BlockSpec((B, C), lambda g: (0, 0)),             # carry0 (tiny, resident)
            pl.BlockSpec((C, T * C), lambda g: (0, 0)),         # stacked W0 powers
            pl.BlockSpec((S, B, T * C), lambda g: (g, 0, 0)),   # q, pipelined per block
        ],
        out_specs=pl.BlockSpec((S, B, T * C), lambda g: (g, 0, 0)),
        scratch_shapes=[pltpu.VMEM((B, C), jnp.float32)],       # persistent carry
        compiler_params=pltpu.CompilerParams(
            dimension_semantics=("arbitrary",)),                # carry crosses grid steps
    )(carry0, wflat, q)

    # ---- Stitch ONLY the modified window back into the sequence. -----------
    # y_flat[c, b, t*C+o] = y[c*T + t + 1][b, o]; positions 1..n_steps change.
    y_win = (y_flat.reshape(n_chunks_pad, B, T, C)
                   .transpose(1, 3, 0, 2)
                   .reshape(B, C, n_steps_pad)[:, :, :n_steps])
    out = jax.lax.dynamic_update_slice(x_f32, y_win, (0, 0, 1))
    return out.astype(x_bcl.dtype)


def reference_forward_np(x_bcl, weight, n_dil):
    """float64 NumPy reference with the exact PyTorch loop semantics."""
    x = np.array(x_bcl, dtype=np.float64).copy()
    w = np.array(weight, dtype=np.float64)
    _, _, K = w.shape
    filter_size = (K - 1) * n_dil + 1
    n_steps = x.shape[2] - filter_size
    for i in range(n_steps):
        sl = x[:, :, i:i + filter_size:n_dil]               # (B, C_in, K)
        x[:, :, i + 1] = np.einsum('oik,bik->bo', w, sl)    # conv1d, length-1 out
    return x


if __name__ == "__main__":
    # Module hyper-parameters (small; n_in_chan == n_out_chan as forward requires).
    # filter_size = 5, n_steps = 59, T = 16 -> 4 chunks, 2 chunks/block,
    # grid = (2,): exercises step padding, multi-chunk blocks and the
    # carry-across-grid-steps path.
    n_elem, n_filt, n_dil = 64, 3, 2
    n_in_chan = n_out_chan = 8
    batch = 2

    key = jax.random.PRNGKey(0)
    kx, kw = jax.random.split(key)

    x = jax.random.normal(kx, (batch, n_in_chan, n_elem), dtype=jnp.float32)

    # Deterministic xavier_uniform_ for a (C_out, C_in, K) conv weight.
    fan_in = n_in_chan * n_filt
    fan_out = n_out_chan * n_filt
    bound = float(np.sqrt(6.0 / (fan_in + fan_out)))
    weight = jax.random.uniform(
        kw, (n_out_chan, n_in_chan, n_filt),
        minval=-bound, maxval=bound, dtype=jnp.float32)

    x_np = np.asarray(x)
    w_np = np.asarray(weight)

    fwd = jax.jit(strided_conv_forward, static_argnums=2)
    out = jax.block_until_ready(fwd(x, weight, n_dil))

    ref = reference_forward_np(x_np, w_np, n_dil)
    np.testing.assert_allclose(np.asarray(out), ref, rtol=5e-2, atol=5e-2)

    print("KERNEL_OK")
</pallas_src>

<mosaic_0001>
module attributes {stable_mosaic.version = 11 : i64} {
  func.func @kernel(%arg0: i32, %arg1: memref<2x8xf32, #tpu.memory_space<vmem>>, %arg2: memref<8x128xf32, #tpu.memory_space<vmem>>, %arg3: memref<2x2x128xf32, #tpu.memory_space<vmem>>, %arg4: memref<2x2x128xf32, #tpu.memory_space<vmem>>, %arg5: memref<2x8xf32, #tpu.memory_space<vmem>>) attributes {dimension_semantics = [#tpu.dimension_semantics<arbitrary>], iteration_bounds = array<i64: 2>, scalar_prefetch = 0 : i64, scratch_operands = 1 : i64, tpu.core_type = #tpu.core_type<tc>, window_params = [{pipeline_mode = #tpu.pipeline_mode<synchronous>, transform_indices = @transform_0, window_bounds = array<i64: 2, 8>}, {pipeline_mode = #tpu.pipeline_mode<synchronous>, transform_indices = @transform_1, window_bounds = array<i64: 8, 128>}, {transform_indices = @transform_2, window_bounds = array<i64: 2, 2, 128>}, {transform_indices = @transform_3, window_bounds = array<i64: 2, 2, 128>}]} {
    %c0_i32 = arith.constant 0 : i32
    %0 = arith.cmpi eq, %arg0, %c0_i32 : i32
    %1 = arith.extui %0 : i1 to i32
    %c0_i32_0 = arith.constant 0 : i32
    %2 = arith.cmpi ne, %1, %c0_i32_0 : i32
    scf.if %2 {
      %c0_18 = arith.constant 0 : index
      %c0_19 = arith.constant 0 : index
      %31 = vector.load %arg1[%c0_18, %c0_19] : memref<2x8xf32, #tpu.memory_space<vmem>>, vector<2x8xf32>
      %c0_20 = arith.constant 0 : index
      %c0_21 = arith.constant 0 : index
      %32 = vector.load %arg5[%c0_20, %c0_21] : memref<2x8xf32, #tpu.memory_space<vmem>>, vector<2x8xf32>
      tpu.vector_store %arg5[%c0_20, %c0_21], %31 {strides = array<i32>} : memref<2x8xf32, #tpu.memory_space<vmem>>, vector<2x8xf32>,
    } else {
    }
    %c0 = arith.constant 0 : index
    %c0_1 = arith.constant 0 : index
    %3 = vector.load %arg2[%c0, %c0_1] : memref<8x128xf32, #tpu.memory_space<vmem>>, vector<8x128xf32>
    %4 = vector.extract_strided_slice %3 {offsets = [0, 120], sizes = [8, 8], strides = [1, 1]} : vector<8x128xf32> to vector<8x8xf32>
    %c0_2 = arith.constant 0 : index
    %c0_3 = arith.constant 0 : index
    %5 = vector.load %arg5[%c0_2, %c0_3] : memref<2x8xf32, #tpu.memory_space<vmem>>, vector<2x8xf32>
    %c0_i32_4 = arith.constant 0 : i32
    %6 = arith.index_cast %c0_i32_4 : i32 to index
    %c0_5 = arith.constant 0 : index
    %c0_6 = arith.constant 0 : index
    %7 = vector.load %arg3[%6, %c0_5, %c0_6] : memref<2x2x128xf32, #tpu.memory_space<vmem>>, vector<1x2x128xf32>
    %8 = vector.shape_cast %7 : vector<1x2x128xf32> to vector<2x128xf32>
    %cst = arith.constant dense<0.000000e+00> : vector<2x128xf32>
    %9 = tpu.matmul %5, %3, %cst {dimension_numbers = #tpu.dot_dimension_numbers<[1], [0], [0], [1], [0, 0, 1, 1], [], []>} : vector<2x8xf32>, vector<8x128xf32>, vector<2x128xf32> -> vector<2x128xf32>
    %10 = arith.addf %9, %8 : vector<2x128xf32>
    %11 = arith.index_cast %c0_i32_4 : i32 to index
    %c0_7 = arith.constant 0 : index
    %c0_8 = arith.constant 0 : index
    %12 = vector.load %arg4[%11, %c0_7, %c0_8] : memref<2x2x128xf32, #tpu.memory_space<vmem>>, vector<1x2x128xf32>
    %13 = vector.shape_cast %12 : vector<1x2x128xf32> to vector<2x128xf32>
    %14 = vector.shape_cast %10 : vector<2x128xf32> to vector<1x2x128xf32>
    tpu.vector_store %arg4[%11, %c0_7, %c0_8], %14 {strides = array<i32>} : memref<2x2x128xf32, #tpu.memory_space<vmem>>, vector<1x2x128xf32>,
    %cst_9 = arith.constant dense<0.000000e+00> : vector<2x8xf32>
    %15 = tpu.matmul %5, %4, %cst_9 {dimension_numbers = #tpu.dot_dimension_numbers<[1], [0], [0], [1], [0, 0, 1, 1], [], []>} : vector<2x8xf32>, vector<8x8xf32>, vector<2x8xf32> -> vector<2x8xf32>
    %16 = vector.extract_strided_slice %8 {offsets = [0, 120], sizes = [2, 8], strides = [1, 1]} : vector<2x128xf32> to vector<2x8xf32>
    %17 = arith.addf %15, %16 : vector<2x8xf32>
    %c1_i32 = arith.constant 1 : i32
    %18 = arith.index_cast %c1_i32 : i32 to index
    %c0_10 = arith.constant 0 : index
    %c0_11 = arith.constant 0 : index
    %19 = vector.load %arg3[%18, %c0_10, %c0_11] : memref<2x2x128xf32, #tpu.memory_space<vmem>>, vector<1x2x128xf32>
    %20 = vector.shape_cast %19 : vector<1x2x128xf32> to vector<2x128xf32>
    %cst_12 = arith.constant dense<0.000000e+00> : vector<2x128xf32>
    %21 = tpu.matmul %17, %3, %cst_12 {dimension_numbers = #tpu.dot_dimension_numbers<[1], [0], [0], [1], [0, 0, 1, 1], [], []>} : vector<2x8xf32>, vector<8x128xf32>, vector<2x128xf32> -> vector<2x128xf32>
    %22 = arith.addf %21, %20 : vector<2x128xf32>
    %23 = arith.index_cast %c1_i32 : i32 to index
    %c0_13 = arith.constant 0 : index
    %c0_14 = arith.constant 0 : index
    %24 = vector.load %arg4[%23, %c0_13, %c0_14] : memref<2x2x128xf32, #tpu.memory_space<vmem>>, vector<1x2x128xf32>
    %25 = vector.shape_cast %24 : vector<1x2x128xf32> to vector<2x128xf32>
    %26 = vector.shape_cast %22 : vector<2x128xf32> to vector<1x2x128xf32>
    tpu.vector_store %arg4[%23, %c0_13, %c0_14], %26 {strides = array<i32>} : memref<2x2x128xf32, #tpu.memory_space<vmem>>, vector<1x2x128xf32>,
    %cst_15 = arith.constant dense<0.000000e+00> : vector<2x8xf32>
    %27 = tpu.matmul %17, %4, %cst_15 {dimension_numbers = #tpu.dot_dimension_numbers<[1], [0], [0], [1], [0, 0, 1, 1], [], []>} : vector<2x8xf32>, vector<8x8xf32>, vector<2x8xf32> -> vector<2x8xf32>
    %28 = vector.extract_strided_slice %20 {offsets = [0, 120], sizes = [2, 8], strides = [1, 1]} : vector<2x128xf32> to vector<2x8xf32>
    %29 = arith.addf %27, %28 : vector<2x8xf32>
    %c2_i32 = arith.constant 2 : i32
    %c0_16 = arith.constant 0 : index
    %c0_17 = arith.constant 0 : index
    %30 = vector.load %arg5[%c0_16, %c0_17] : memref<2x8xf32, #tpu.memory_space<vmem>>, vector<2x8xf32>
    tpu.vector_store %arg5[%c0_16, %c0_17], %29 {strides = array<i32>} : memref<2x8xf32, #tpu.memory_space<vmem>>, vector<2x8xf32>,
    return
  }
  func.func @transform_0(%arg0: i32) -> (i32, i32) {
    %c0_i32 = arith.constant 0 : i32
    %c0_i32_0 = arith.constant 0 : i32
    %c0_i32_1 = arith.constant 0 : i32
    return %c0_i32, %c0_i32_0 : i32, i32
  }
  func.func @transform_1(%arg0: i32) -> (i32, i32) {
    %c0_i32 = arith.constant 0 : i32
    %c0_i32_0 = arith.constant 0 : i32
    %c0_i32_1 = arith.constant 0 : i32
    return %c0_i32, %c0_i32_0 : i32, i32
  }
  func.func @transform_2(%arg0: i32) -> (i32, i32, i32) {
    %c0_i32 = arith.constant 0 : i32
    %c0_i32_0 = arith.constant 0 : i32
    %c0_i32_1 = arith.constant 0 : i32
    return %arg0, %c0_i32, %c0_i32_0 : i32, i32, i32
  }
  func.func @transform_3(%arg0: i32) -> (i32, i32, i32) {
    %c0_i32 = arith.constant 0 : i32
    %c0_i32_0 = arith.constant 0 : i32
    %c0_i32_1 = arith.constant 0 : i32
    return %arg0, %c0_i32, %c0_i32_0 : i32, i32, i32
  }
}

</mosaic_0001>

<llo_original>
// kernel: custom-call.2
$region0: #{custom-call.2}
  %s0 = inlined_call_operand.vmem [shape: f32[16,8,8], index: 0, kind: output, shape index: {}]

// kernel: strided_conv_forward.1
$region0: #{strided_conv_forward.1}
  #allocation0 [shape = 'u32[]', space=smem, size = 0x4, offset = 0x4, fixed_abs, tag = 'smem constant byte address 0x4 - core index']
  #allocation1 [shape = 'u32[144,128]{1,0:T(1,128)}', space=vmem, size = 0x12000, scoped, tag = 'internal scratch']
  #allocation2 [shape = 'f32[2,8]{1,0:T(2,128)}', space=vmem, size = 0x400, scoped, tag = 'scratch operand']
  %s0 = inlined_call_operand.vmem [shape: f32[2,8], index: 0, kind: input, shape index: {}]
  %s1 = inlined_call_operand.vmem [shape: f32[8,128], index: 1, kind: input, shape index: {}]
  %s2 = inlined_call_operand.vmem [shape: f32[4,2,128], index: 2, kind: input, shape index: {}]
  %s3 = inlined_call_operand.vmem [shape: f32[4,2,128], index: 3, kind: output, shape index: {}]
  %s4 = sld [smem:[#allocation0]]
  $region49: #{strided_conv_forward.1} parent=0
    _
  %s6 = ssub.s32 1, %s4
  %s7 = scalar_select 0, %s6, %s4
  loop: start=0, step=1, limit=4
  $region2: #{strided_conv_forward.1} parent=0 // loop_pre_header
    _
  $region3: #{strided_conv_forward.1} parent=0 // loop_header
    %s9 = sphi 0, %s13
    %p10 = scmp.ge.s32.totalorder %s9, 4
    %s17 = sphi 0, %s17
    %s19 = sphi 0, %s17
    %s20 = sphi 0, %s19
    %s34 = sphi 0, %s20
    %s38 = sphi 0, %s38
    %s40 = sphi 0, %s38
    %s41 = sphi 0, %s40
    %s55 = sphi 0, %s41
    %s61 = sphi 0, %s63
    %s64 = sphi 0, %s61
    %s65 = sphi 0, %s64
    %s81 = sphi 0, %s65
    %s87 = sphi 0, %s89
    %s90 = sphi 0, %s87
    %s91 = sphi 0, %s90
    %s107 = sphi 0, %s91
  $region4: #{strided_conv_forward.1} parent=0 // loop_header_branch
    %12 = sbr.rel (%p10) target = $region8
  $region5: #{strided_conv_forward.1} parent=0 // loop_body
    %s14 = ssub.s32 %s9, 1
    %s15 = ssub.s32 %s9, 2
    %s16 = sadd.s32 %s9, 1
    %s18 = sadd.s32 %s17, 1
    %p21 = scmp.eq.s32.totalorder %s9, 1
    %p22 = scmp.ne.s32.totalorder %s17, %s19
    %p23 = scmp.eq.s32.totalorder %s9, 0
    %p24 = por %p22, %p23
    %p25 = scmp.ne.s32.totalorder %s17, %s19
    %p26 = scmp.eq.s32.totalorder %s14, 1
    %p27 = por %p25, %p26
    %p28 = scmp.ne.s32.totalorder %s19, %s20
    %p29 = scmp.eq.s32.totalorder %s14, 0
    %p30 = por %p28, %p29
    %p31 = scmp.ne.s32.totalorder %s19, %s20
    %p32 = scmp.eq.s32.totalorder %s15, 1
    %p33 = por %p31, %p32
    %p35 = scmp.ne.s32.totalorder %s20, %s34
    %p36 = scmp.eq.s32.totalorder %s15, 0
    %p37 = por %p35, %p36
    %s39 = sadd.s32 %s38, 1
    %p42 = scmp.eq.s32.totalorder %s9, 1
    %p43 = scmp.ne.s32.totalorder %s38, %s40
    %p44 = scmp.eq.s32.totalorder %s9, 0
    %p45 = por %p43, %p44
    %p46 = scmp.ne.s32.totalorder %s38, %s40
    %p47 = scmp.eq.s32.totalorder %s14, 1
    %p48 = por %p46, %p47
    %p49 = scmp.ne.s32.totalorder %s40, %s41
    %p50 = scmp.eq.s32.totalorder %s14, 0
    %p51 = por %p49, %p50
    %p52 = scmp.ne.s32.totalorder %s40, %s41
    %p53 = scmp.eq.s32.totalorder %s15, 1
    %p54 = por %p52, %p53
    %p56 = scmp.ne.s32.totalorder %s41, %s55
    %p57 = scmp.eq.s32.totalorder %s15, 0
    %p58 = por %p56, %p57
    %s59 = ssub.s32 %s9, %s16
    %p60 = scmp.eq.s32.totalorder %s59, 0
    %s62 = sadd.s32 %s61, 1
    %s63 = scalar_select %p60, %s61, %s62
    %p66 = pneg %p60
    %p67 = scmp.eq.s32.totalorder %s9, 1
    %p68 = por %p66, %p67
    %p69 = scmp.ne.s32.totalorder %s61, %s64
    %p70 = scmp.eq.s32.totalorder %s9, 0
    %p71 = por %p69, %p70
    %p72 = scmp.ne.s32.totalorder %s61, %s64
    %p73 = scmp.eq.s32.totalorder %s14, 1
    %p74 = por %p72, %p73
    %p75 = scmp.ne.s32.totalorder %s64, %s65
    %p76 = scmp.eq.s32.totalorder %s14, 0
    %p77 = por %p75, %p76
    %p78 = scmp.ne.s32.totalorder %s64, %s65
    %p79 = scmp.eq.s32.totalorder %s15, 1
    %p80 = por %p78, %p79
    %p82 = scmp.ne.s32.totalorder %s65, %s81
    %p83 = scmp.eq.s32.totalorder %s15, 0
    %p84 = por %p82, %p83
    %s85 = ssub.s32 %s9, %s16
    %p86 = scmp.eq.s32.totalorder %s85, 0
    %s88 = sadd.s32 %s87, 1
    %s89 = scalar_select %p86, %s87, %s88
    %p92 = pneg %p86
    %p93 = scmp.eq.s32.totalorder %s9, 1
    %p94 = por %p92, %p93
    %p95 = scmp.ne.s32.totalorder %s87, %s90
    %p96 = scmp.eq.s32.totalorder %s9, 0
    %p97 = por %p95, %p96
    %p98 = scmp.ne.s32.totalorder %s87, %s90
    %p99 = scmp.eq.s32.totalorder %s14, 1
    %p100 = por %p98, %p99
    %p101 = scmp.ne.s32.totalorder %s90, %s91
    %p102 = scmp.eq.s32.totalorder %s14, 0
    %p103 = por %p101, %p102
    %p104 = scmp.ne.s32.totalorder %s90, %s91
    %p105 = scmp.eq.s32.totalorder %s15, 1
    %p106 = por %p104, %p105
    %p108 = scmp.ne.s32.totalorder %s91, %s107
    %p109 = scmp.eq.s32.totalorder %s15, 0
    %p110 = por %p108, %p109
    %p111 = scmp.le.s32.totalorder 1, %s9
    %p112 = scmp.lt.s32.totalorder %s9, 3
    %p113 = pnand %p111, %p112
    %p114 = pneg %p113
    // Predicated region
    $region9: #{strided_conv_forward.1} parent=5 // pred_check
      _
    $region10: #{strided_conv_forward.1} parent=5 // pred_check_branch
      %116 = sbr.rel (%p113) target = $region12
    $region11: #{strided_conv_forward.1} parent=5 // pred_region
      %s117 = ssub.s32 %s9, 1
      // Predicated region
      $region13: #{strided_conv_forward.1} parent=11 // pred_check
        %p118 = pneg %p30
      $region14: #{strided_conv_forward.1} parent=11 // pred_check_branch
        %120 = sbr.rel (%p118) target = $region16
      $region15: #{strided_conv_forward.1} parent=11 // pred_region
        _
      $region16: #{strided_conv_forward.1} parent=11 // pred_fallthru
        _
      // Predicated region
      $region17: #{strided_conv_forward.1} parent=11 // pred_check
        %p121 = pneg %p51
      $region18: #{strided_conv_forward.1} parent=11 // pred_check_branch
        %123 = sbr.rel (%p121) target = $region20
      $region19: #{strided_conv_forward.1} parent=11 // pred_region
        _
      $region20: #{strided_conv_forward.1} parent=11 // pred_fallthru
        _
    $region12: #{strided_conv_forward.1} parent=5 // pred_fallthru
      _
    %p124 = scmp.lt.s32.totalorder %s9, 2
    // Predicated region
    $region21: #{strided_conv_forward.1} parent=5 // pred_check
      %p125 = pneg %p124
    $region22: #{strided_conv_forward.1} parent=5 // pred_check_branch
      %127 = sbr.rel (%p125) target = $region24
    $region23: #{strided_conv_forward.1} parent=5 // pred_region
      // Predicated region
      $region25: #{strided_conv_forward.1} parent=23 // pred_check
        %p128 = pneg %p71
      $region26: #{strided_conv_forward.1} parent=23 // pred_check_branch
        %130 = sbr.rel (%p128) target = $region28
      $region27: #{strided_conv_forward.1} parent=23 // pred_region
        %s131 = smul.u32 2, %s9
        %p132 = scmp.lt.s32.totalorder %s131, 3
        %s133 = scalar_select %p132, %s131, 3
        %s134 = smul.addr %s133, 2
        %s135 = scalar_lea.vmem %s2, %s134
        %s136 = smul.u32 2, %s9
      $region28: #{strided_conv_forward.1} parent=23 // pred_fallthru
        _
    $region24: #{strided_conv_forward.1} parent=5 // pred_fallthru
      _
    %p137 = scmp.le.s32.totalorder 1, %s9
    %p138 = scmp.lt.s32.totalorder %s9, 3
    %p139 = pnand %p137, %p138
    %p140 = pneg %p139
    // Predicated region
    $region29: #{strided_conv_forward.1} parent=5 // pred_check
      _
    $region30: #{strided_conv_forward.1} parent=5 // pred_check_branch
      %142 = sbr.rel (%p139) target = $region32
    $region31: #{strided_conv_forward.1} parent=5 // pred_region
      %s143 = ssub.s32 %s9, 1
      %p144 = pneg %p30
      %p145 = pneg %p27
      %p146 = pneg %p51
      %p147 = pneg %p48
      %s148 = smul.u32 2, %s14
      %p149 = scmp.lt.s32.totalorder %s148, 3
      %s150 = scalar_select %p149, %s148, 3
      %s151 = smul.addr %s150, 2
      %s152 = scalar_lea.vmem %s2, %s151
      %p153 = pneg %p77
      %p154 = pneg %p74
      %p155 = pneg %p103
      %p156 = pneg %p100
      %s157 = smul.u32 2, %s14
      %p158 = scmp.lt.s32.totalorder %s157, 3
      %s159 = scalar_select %p158, %s157, 3
      %s160 = smul.addr %s159, 2
      %s161 = scalar_lea.vmem %s3, %s160
      %s162 = smul.u32 2, %s14
      %p163 = scmp.lt.s32.totalorder %s162, 3
      %s164 = scalar_select %p163, %s162, 3
      %s165 = smul.addr %s164, 2
      %s166 = scalar_lea.vmem %s2, %s165
      %s167 = smul.u32 2, %s14
      %s168 = smul.u32 2, %s14
      %p169 = scmp.lt.s32.totalorder %s168, 3
      %s170 = scalar_select %p169, %s168, 3
      %s171 = smul.addr %s170, 2
      %s172 = scalar_lea.vmem %s3, %s171
      %s173 = smul.u32 2, %s14
      %p174 = scmp.eq.s32.totalorder %s14, 0
      // Predicated region
      $region33: #{strided_conv_forward.1} parent=31 // pred_check
        %p175 = pneg %p174
      $region34: #{strided_conv_forward.1} parent=31 // pred_check_branch
        %177 = sbr.rel (%p175) target = $region36
      $region35: #{strided_conv_forward.1} parent=31 // pred_region
        %v178 = vld [vmem:[%s0] sm:$0x3]
        %vm179 = vcmask 58368
        %180 = vst.msk [vmem:[#allocation2] sm:$0x3] %vm179, %v178
      $region36: #{strided_conv_forward.1} parent=31 // pred_fallthru
        _
      %v181 = vld [vmem:[%s1] sm:$0xff]
      %v182 = vld [vmem:[#allocation2] sm:$0x3]
      %v183 = vld [vmem:[%s166] sm:$0x3]
      %vm184 = vcmask 64512
      %v186 = vsel %vm184, %v182, 0
      %188 = vmatprep.subr.mxu0 0.0
      %189 = vmatpush1.msra.mxu0 %v181
      %190 = vmatprep.subr.mxu0 0.0
      %191 = vmatpush1.msra.mxu0 0.0
      %192 = vmatprep.subr.mxu0 0.0
      %193 = vmatpush1.msra.mxu0 0.0
      %194 = vmatprep.subr.mxu0 0.0
      %195 = vmatpush1.msra.mxu0 0.0
      %196 = vmatprep.subr.mxu0 0.0
      %197 = vmatpush1.msra.mxu0 0.0
      %198 = vmatprep.subr.mxu0 0.0
      %199 = vmatpush1.msra.mxu0 0.0
      %200 = vmatprep.subr.mxu0 0.0
      %201 = vmatpush1.msra.mxu0 0.0
      %202 = vmatprep.subr.mxu0 0.0
      %203 = vmatpush1.msra.mxu0 0.0
      %204 = vmatprep.subr.mxu0 0.0
      %205 = vmatpush1.msra.mxu0 0.0
      %206 = vmatprep.subr.mxu0 0.0
      %207 = vmatpush1.msra.mxu0 0.0
      %208 = vmatprep.subr.mxu0 0.0
      %209 = vmatpush1.msra.mxu0 0.0
      %210 = vmatprep.subr.mxu0 0.0
      %211 = vmatpush1.msra.mxu0 0.0
      %212 = vmatprep.subr.mxu0 0.0
      %213 = vmatpush1.msra.mxu0 0.0
      %214 = vmatprep.subr.mxu0 0.0
      %215 = vmatpush1.msra.mxu0 0.0
      %216 = vmatprep.subr.mxu0 0.0
      %217 = vmatpush1.msra.mxu0 0.0
      %218 = vmatprep.subr.mxu0 0.0
      %219 = vmatpush1.msra.mxu0 0.0
      %220 = vmatprep.subr.mxu0 0.0
      %221 = vmatpush1.msra.mxu0 0.0
      %222 = vmatprep.subr.mxu0 0.0
      %223 = vmatpush1.msra.mxu0 0.0
      %224 = vmatprep.subr.mxu0 0.0
      %225 = vmatpush1.msra.mxu0 0.0
      %226 = vmatprep.subr.mxu0 0.0
      %227 = vmatpush1.msra.mxu0 0.0
      %228 = vmatprep.subr.mxu0 0.0
      %229 = vmatpush1.msra.mxu0 0.0
      %230 = vmatprep.subr.mxu0 0.0
      %231 = vmatpush1.msra.mxu0 0.0
      %232 = vmatprep.subr.mxu0 0.0
      %233 = vmatpush1.msra.mxu0 0.0
      %234 = vmatprep.subr.mxu0 0.0
      %235 = vmatpush1.msra.mxu0 0.0
      %236 = vmatprep.subr.mxu0 0.0
      %237 = vmatpush1.msra.mxu0 0.0
      %238 = vmatprep.subr.mxu0 0.0
      %239 = vmatpush1.msra.mxu0 0.0
      %240 = vmatprep.subr.mxu0 0.0
      %241 = vmatpush1.msra.mxu0 0.0
      %242 = vmatprep.subr.mxu0 0.0
      %243 = vmatpush1.msra.mxu0 0.0
      %244 = vmatprep.subr.mxu0 0.0
      %245 = vmatpush1.msra.mxu0 0.0
      %246 = vmatprep.subr.mxu0 0.0
      %247 = vmatpush1.msra.mxu0 0.0
      %248 = vmatprep.subr.mxu0 0.0
      %249 = vmatpush1.msra.mxu0 0.0
      %250 = vmatprep.subr.mxu0 0.0
      %251 = vmatpush1.msra.mxu0 0.0
      %252 = vmatprep.mubr.f32.mxu0 0.0
      %253 = vmatmul.mubr.f32.gmra.mrb[0].mxu0 %v186
      %v254 = vpop.f32.mrb[0].mxu0
      %v255 = vadd.f32 %v183, %v254
      %v256 = vpop.f32.mrb[0].mxu0
      %257 = vdwg.mxu0
      %258 = vst [vmem:[%s172] sm:$0x3] %v255
      %260 = vrot.lane.b32.xlu0 %v181, 8
      %v261 = vpop.permute.xlu0 %260
      %264 = vrot.lane.b32.xlu0 %v183, 8
      %v265 = vpop.permute.xlu0 %264
      %267 = vmatprep.subr.mxu0 0.0
      %268 = vmatpush1.msra.mxu0 %v261
      %269 = vmatprep.subr.mxu0 0.0
      %270 = vmatpush1.msra.mxu0 0.0
      %271 = vmatprep.subr.mxu0 0.0
      %272 = vmatpush1.msra.mxu0 0.0
      %273 = vmatprep.subr.mxu0 0.0
      %274 = vmatpush1.msra.mxu0 0.0
      %275 = vmatprep.subr.mxu0 0.0
      %276 = vmatpush1.msra.mxu0 0.0
      %277 = vmatprep.subr.mxu0 0.0
      %278 = vmatpush1.msra.mxu0 0.0
      %279 = vmatprep.subr.mxu0 0.0
      %280 = vmatpush1.msra.mxu0 0.0
      %281 = vmatprep.subr.mxu0 0.0
      %282 = vmatpush1.msra.mxu0 0.0
      %283 = vmatprep.subr.mxu0 0.0
      %284 = vmatpush1.msra.mxu0 0.0
      %285 = vmatprep.subr.mxu0 0.0
      %286 = vmatpush1.msra.mxu0 0.0
      %287 = vmatprep.subr.mxu0 0.0
      %288 = vmatpush1.msra.mxu0 0.0
      %289 = vmatprep.subr.mxu0 0.0
      %290 = vmatpush1.msra.mxu0 0.0
      %291 = vmatprep.subr.mxu0 0.0
      %292 = vmatpush1.msra.mxu0 0.0
      %293 = vmatprep.subr.mxu0 0.0
      %294 = vmatpush1.msra.mxu0 0.0
      %295 = vmatprep.subr.mxu0 0.0
      %296 = vmatpush1.msra.mxu0 0.0
      %297 = vmatprep.subr.mxu0 0.0
      %298 = vmatpush1.msra.mxu0 0.0
      %299 = vmatprep.subr.mxu0 0.0
      %300 = vmatpush1.msra.mxu0 0.0
      %301 = vmatprep.subr.mxu0 0.0
      %302 = vmatpush1.msra.mxu0 0.0
      %303 = vmatprep.subr.mxu0 0.0
      %304 = vmatpush1.msra.mxu0 0.0
      %305 = vmatprep.subr.mxu0 0.0
      %306 = vmatpush1.msra.mxu0 0.0
      %307 = vmatprep.subr.mxu0 0.0
      %308 = vmatpush1.msra.mxu0 0.0
      %309 = vmatprep.subr.mxu0 0.0
      %310 = vmatpush1.msra.mxu0 0.0
      %311 = vmatprep.subr.mxu0 0.0
      %312 = vmatpush1.msra.mxu0 0.0
      %313 = vmatprep.subr.mxu0 0.0
      %314 = vmatpush1.msra.mxu0 0.0
      %315 = vmatprep.subr.mxu0 0.0
      %316 = vmatpush1.msra.mxu0 0.0
      %317 = vmatprep.subr.mxu0 0.0
      %318 = vmatpush1.msra.mxu0 0.0
      %319 = vmatprep.subr.mxu0 0.0
      %320 = vmatpush1.msra.mxu0 0.0
      %321 = vmatprep.subr.mxu0 0.0
      %322 = vmatpush1.msra.mxu0 0.0
      %323 = vmatprep.subr.mxu0 0.0
      %324 = vmatpush1.msra.mxu0 0.0
      %325 = vmatprep.subr.mxu0 0.0
      %326 = vmatpush1.msra.mxu0 0.0
      %327 = vmatprep.subr.mxu0 0.0
      %328 = vmatpush1.msra.mxu0 0.0
      %329 = vmatprep.subr.mxu0 0.0
      %330 = vmatpush1.msra.mxu0 0.0
      %331 = vmatprep.mubr.f32.mxu0 0.0
      %332 = vmatmul.mubr.f32.gmra.mrb[0].mxu0 %v186
      %v333 = vpop.f32.mrb[0].mxu0
      %v334 = vadd.f32 %v265, %v333
      %v335 = vpop.f32.mrb[0].mxu0
      %336 = vdwg.mxu0
      %s337 = scalar_lea.vmem %s166, 2
      %v338 = vld [vmem:[%s337] sm:$0x3]
      %v340 = vsel %vm184, %v334, 0
      %342 = vmatprep.subr.mxu0 0.0
      %343 = vmatpush1.msra.mxu0 %v181
      %344 = vmatprep.subr.mxu0 0.0
      %345 = vmatpush1.msra.mxu0 0.0
      %346 = vmatprep.subr.mxu0 0.0
      %347 = vmatpush1.msra.mxu0 0.0
      %348 = vmatprep.subr.mxu0 0.0
      %349 = vmatpush1.msra.mxu0 0.0
      %350 = vmatprep.subr.mxu0 0.0
      %351 = vmatpush1.msra.mxu0 0.0
      %352 = vmatprep.subr.mxu0 0.0
      %353 = vmatpush1.msra.mxu0 0.0
      %354 = vmatprep.subr.mxu0 0.0
      %355 = vmatpush1.msra.mxu0 0.0
      %356 = vmatprep.subr.mxu0 0.0
      %357 = vmatpush1.msra.mxu0 0.0
      %358 = vmatprep.subr.mxu0 0.0
      %359 = vmatpush1.msra.mxu0 0.0
      %360 = vmatprep.subr.mxu0 0.0
      %361 = vmatpush1.msra.mxu0 0.0
      %362 = vmatprep.subr.mxu0 0.0
      %363 = vmatpush1.msra.mxu0 0.0
      %364 = vmatprep.subr.mxu0 0.0
      %365 = vmatpush1.msra.mxu0 0.0
      %366 = vmatprep.subr.mxu0 0.0
      %367 = vmatpush1.msra.mxu0 0.0
      %368 = vmatprep.subr.mxu0 0.0
      %369 = vmatpush1.msra.mxu0 0.0
      %370 = vmatprep.subr.mxu0 0.0
      %371 = vmatpush1.msra.mxu0 0.0
      %372 = vmatprep.subr.mxu0 0.0
      %373 = vmatpush1.msra.mxu0 0.0
      %374 = vmatprep.subr.mxu0 0.0
      %375 = vmatpush1.msra.mxu0 0.0
      %376 = vmatprep.subr.mxu0 0.0
      %377 = vmatpush1.msra.mxu0 0.0
      %378 = vmatprep.subr.mxu0 0.0
      %379 = vmatpush1.msra.mxu0 0.0
      %380 = vmatprep.subr.mxu0 0.0
      %381 = vmatpush1.msra.mxu0 0.0
      %382 = vmatprep.subr.mxu0 0.0
      %383 = vmatpush1.msra.mxu0 0.0
      %384 = vmatprep.subr.mxu0 0.0
      %385 = vmatpush1.msra.mxu0 0.0
      %386 = vmatprep.subr.mxu0 0.0
      %387 = vmatpush1.msra.mxu0 0.0
      %388 = vmatprep.subr.mxu0 0.0
      %389 = vmatpush1.msra.mxu0 0.0
      %390 = vmatprep.subr.mxu0 0.0
      %391 = vmatpush1.msra.mxu0 0.0
      %392 = vmatprep.subr.mxu0 0.0
      %393 = vmatpush1.msra.mxu0 0.0
      %394 = vmatprep.subr.mxu0 0.0
      %395 = vmatpush1.msra.mxu0 0.0
      %396 = vmatprep.subr.mxu0 0.0
      %397 = vmatpush1.msra.mxu0 0.0
      %398 = vmatprep.subr.mxu0 0.0
      %399 = vmatpush1.msra.mxu0 0.0
      %400 = vmatprep.subr.mxu0 0.0
      %401 = vmatpush1.msra.mxu0 0.0
      %402 = vmatprep.subr.mxu0 0.0
      %403 = vmatpush1.msra.mxu0 0.0
      %404 = vmatprep.subr.mxu0 0.0
      %405 = vmatpush1.msra.mxu0 0.0
      %406 = vmatprep.mubr.f32.mxu0 0.0
      %407 = vmatmul.mubr.f32.gmra.mrb[0].mxu0 %v340
      %v408 = vpop.f32.mrb[0].mxu0
      %v409 = vadd.f32 %v338, %v408
      %v410 = vpop.f32.mrb[0].mxu0
      %411 = vdwg.mxu0
      %s412 = scalar_lea.vmem %s172, 2
      %413 = vst [vmem:[%s412] sm:$0x3] %v409
      %415 = vrot.lane.b32.xlu0 %v338, 8
      %v416 = vpop.permute.xlu0 %415
      %418 = vmatprep.subr.mxu0 0.0
      %419 = vmatpush1.msra.mxu0 %v261
      %420 = vmatprep.subr.mxu0 0.0
      %421 = vmatpush1.msra.mxu0 0.0
      %422 = vmatprep.subr.mxu0 0.0
      %423 = vmatpush1.msra.mxu0 0.0
      %424 = vmatprep.subr.mxu0 0.0
      %425 = vmatpush1.msra.mxu0 0.0
      %426 = vmatprep.subr.mxu0 0.0
      %427 = vmatpush1.msra.mxu0 0.0
      %428 = vmatprep.subr.mxu0 0.0
      %429 = vmatpush1.msra.mxu0 0.0
      %430 = vmatprep.subr.mxu0 0.0
      %431 = vmatpush1.msra.mxu0 0.0
      %432 = vmatprep.subr.mxu0 0.0
      %433 = vmatpush1.msra.mxu0 0.0
      %434 = vmatprep.subr.mxu0 0.0
      %435 = vmatpush1.msra.mxu0 0.0
      %436 = vmatprep.subr.mxu0 0.0
      %437 = vmatpush1.msra.mxu0 0.0
      %438 = vmatprep.subr.mxu0 0.0
      %439 = vmatpush1.msra.mxu0 0.0
      %440 = vmatprep.subr.mxu0 0.0
      %441 = vmatpush1.msra.mxu0 0.0
      %442 = vmatprep.subr.mxu0 0.0
      %443 = vmatpush1.msra.mxu0 0.0
      %444 = vmatprep.subr.mxu0 0.0
      %445 = vmatpush1.msra.mxu0 0.0
      %446 = vmatprep.subr.mxu0 0.0
      %447 = vmatpush1.msra.mxu0 0.0
      %448 = vmatprep.subr.mxu0 0.0
      %449 = vmatpush1.msra.mxu0 0.0
      %450 = vmatprep.subr.mxu0 0.0
      %451 = vmatpush1.msra.mxu0 0.0
      %452 = vmatprep.subr.mxu0 0.0
      %453 = vmatpush1.msra.mxu0 0.0
      %454 = vmatprep.subr.mxu0 0.0
      %455 = vmatpush1.msra.mxu0 0.0
      %456 = vmatprep.subr.mxu0 0.0
      %457 = vmatpush1.msra.mxu0 0.0
      %458 = vmatprep.subr.mxu0 0.0
      %459 = vmatpush1.msra.mxu0 0.0
      %460 = vmatprep.subr.mxu0 0.0
      %461 = vmatpush1.msra.mxu0 0.0
      %462 = vmatprep.subr.mxu0 0.0
      %463 = vmatpush1.msra.mxu0 0.0
      %464 = vmatprep.subr.mxu0 0.0
      %465 = vmatpush1.msra.mxu0 0.0
      %466 = vmatprep.subr.mxu0 0.0
      %467 = vmatpush1.msra.mxu0 0.0
      %468 = vmatprep.subr.mxu0 0.0
      %469 = vmatpush1.msra.mxu0 0.0
      %470 = vmatprep.subr.mxu0 0.0
      %471 = vmatpush1.msra.mxu0 0.0
      %472 = vmatprep.subr.mxu0 0.0
      %473 = vmatpush1.msra.mxu0 0.0
      %474 = vmatprep.subr.mxu0 0.0
      %475 = vmatpush1.msra.mxu0 0.0
      %476 = vmatprep.subr.mxu0 0.0
      %477 = vmatpush1.msra.mxu0 0.0
      %478 = vmatprep.subr.mxu0 0.0
      %479 = vmatpush1.msra.mxu0 0.0
      %480 = vmatprep.subr.mxu0 0.0
      %481 = vmatpush1.msra.mxu0 0.0
      %482 = vmatprep.mubr.f32.mxu0 0.0
      %483 = vmatmul.mubr.f32.gmra.mrb[0].mxu0 %v340
      %v484 = vpop.f32.mrb[0].mxu0
      %v485 = vadd.f32 %v416, %v484
      %v486 = vpop.f32.mrb[0].mxu0
      %487 = vdwg.mxu0
      %vm488 = vcmask 58368
      %489 = vst.msk [vmem:[#allocation2] sm:$0x3] %vm488, %v485
      %s490 = smul.u32 2, %s14
      %p491 = scmp.lt.s32.totalorder %s490, 3
      %s492 = scalar_select %p491, %s490, 3
      %s493 = smul.addr %s492, 2
      %s494 = scalar_lea.vmem %s3, %s493
      // Predicated region
      $region37: #{strided_conv_forward.1} parent=31 // pred_check
        %p495 = pneg %p100
      $region38: #{strided_conv_forward.1} parent=31 // pred_check_branch
        %497 = sbr.rel (%p495) target = $region40
      $region39: #{strided_conv_forward.1} parent=31 // pred_region
        %s498 = smul.u32 2, %s14
      $region40: #{strided_conv_forward.1} parent=31 // pred_fallthru
        _
    $region32: #{strided_conv_forward.1} parent=5 // pred_fallthru
      _
    %p499 = scmp.le.s32.totalorder 2, %s9
    // Predicated region
    $region41: #{strided_conv_forward.1} parent=5 // pred_check
      %p500 = pneg %p499
    $region42: #{strided_conv_forward.1} parent=5 // pred_check_branch
      %502 = sbr.rel (%p500) target = $region44
    $region43: #{strided_conv_forward.1} parent=5 // pred_region
      %s503 = ssub.s32 %s9, 2
      // Predicated region
      $region45: #{strided_conv_forward.1} parent=43 // pred_check
        %p504 = pneg %p106
      $region46: #{strided_conv_forward.1} parent=43 // pred_check_branch
        %506 = sbr.rel (%p504) target = $region48
      $region47: #{strided_conv_forward.1} parent=43 // pred_region
        %s507 = smul.u32 2, %s15
        %p508 = scmp.lt.s32.totalorder %s507, 3
        %s509 = scalar_select %p508, %s507, 3
        %s510 = smul.addr %s509, 2
        %s511 = scalar_lea.vmem %s3, %s510
      $region48: #{strided_conv_forward.1} parent=43 // pred_fallthru
        _
    $region44: #{strided_conv_forward.1} parent=5 // pred_fallthru
      _
  $region6: #{strided_conv_forward.1} parent=0 // loop_footer
    %s13 = sadd.s32 1, %s9
  $region7: #{strided_conv_forward.1} parent=0 // loop_footer_branch
    %8 = sbr.rel target = $region3
  $region8: #{strided_conv_forward.1} parent=0 // loop_exit
    _

</llo_original>
